<compile_context>
chip_gen: v7x
topology: tpu7x:2x2x1
jax: 0.10.0
libtpu: 0.0.40
codegen_flags: <defaults>
</compile_context>

<pallas_src>
import random

import jax
import jax.numpy as jnp
from jax import lax
from jax.experimental import pallas as pl
from jax.experimental.pallas import tpu as pltpu

LANE = 128  # TPU lane width; output is padded to this lane-dense width.


def dynamicnet_kernel(n_ref, x_ref, w_in_ref, b_in_ref, w_mid_ref, b_mid_ref,
                      w_out_ref, b_out_ref, y_ref):
    """One batch tile of DynamicNet.

    n_ref     : SMEM (1,) int32 — number of middle-layer repetitions
    x_ref     : (TM, D_in)       bf16
    w_in_ref  : (D_in, H)        bf16
    b_in_ref  : (1, H)           f32
    w_mid_ref : (H, H)           bf16
    b_mid_ref : (1, H)           f32
    w_out_ref : (H, D_out_pad)   bf16   (zero-padded to lane-dense width)
    b_out_ref : (1, D_out_pad)   f32
    y_ref     : (TM, D_out_pad)  f32
    """
    n_mid = n_ref[0]

    # Hoist bias loads / broadcasts out of the loop.
    b_in = b_in_ref[...]
    b_mid = b_mid_ref[...]
    b_out = b_out_ref[...]

    # input_linear + clamp(min=0): bf16 MXU inputs, f32 accumulation.
    h = jnp.dot(x_ref[...], w_in_ref[...], preferred_element_type=jnp.float32)
    h = jnp.maximum(h + b_in, 0.0)

    # middle_linear reused n_mid times. Dynamic trip count (n_mid is an SMEM
    # scalar) — skipped repetitions cost nothing.
    def body(_, h_cur):
        h_new = jnp.dot(h_cur.astype(jnp.bfloat16), w_mid_ref[...],
                        preferred_element_type=jnp.float32)
        return jnp.maximum(h_new + b_mid, 0.0)

    h = lax.fori_loop(0, n_mid, body, h)

    # output_linear (no activation). 128-lane-dense store (unmasked vst).
    y = jnp.dot(h.astype(jnp.bfloat16), w_out_ref[...],
                preferred_element_type=jnp.float32)
    y_ref[...] = y + b_out


def dynamic_net_forward(x, kernel_params, n_mid, d_out, *, tm=128):
    """Runs the Pallas kernel over a 1-D batch grid and un-pads the output."""
    w_in, b_in, w_mid, b_mid, w_out, b_out = kernel_params
    n, d_in = x.shape
    h_dim = w_in.shape[1]
    d_out_pad = w_out.shape[1]
    assert n % tm == 0, "batch must be a multiple of the batch tile"

    n_arr = jnp.asarray([n_mid], dtype=jnp.int32)
    x_bf16 = x.astype(jnp.bfloat16)

    grid_spec = pltpu.PrefetchScalarGridSpec(
        num_scalar_prefetch=1,
        grid=(n // tm,),
        in_specs=[
            pl.BlockSpec((tm, d_in), lambda i, nr: (i, 0)),       # x tile
            pl.BlockSpec((d_in, h_dim), lambda i, nr: (0, 0)),    # w_in (resident)
            pl.BlockSpec((1, h_dim), lambda i, nr: (0, 0)),       # b_in
            pl.BlockSpec((h_dim, h_dim), lambda i, nr: (0, 0)),   # w_mid
            pl.BlockSpec((1, h_dim), lambda i, nr: (0, 0)),       # b_mid
            pl.BlockSpec((h_dim, d_out_pad), lambda i, nr: (0, 0)),  # w_out
            pl.BlockSpec((1, d_out_pad), lambda i, nr: (0, 0)),   # b_out
        ],
        out_specs=pl.BlockSpec((tm, d_out_pad), lambda i, nr: (i, 0)),
    )

    y_pad = pl.pallas_call(
        dynamicnet_kernel,
        out_shape=jax.ShapeDtypeStruct((n, d_out_pad), jnp.float32),
        grid_spec=grid_spec,
        compiler_params=pltpu.CompilerParams(
            dimension_semantics=("parallel",)),  # megacore split on v7x
    )(n_arr, x_bf16, w_in, b_in, w_mid, b_mid, w_out, b_out)

    return y_pad[:, :d_out]


def make_params(key, d_in, h, d_out):
    """Deterministic synthetic parameters (PyTorch Linear-like init), f32."""
    ks = jax.random.split(key, 6)

    def linear(kw, kb, fan_in, fan_out):
        bound = 1.0 / jnp.sqrt(jnp.float32(fan_in))
        # stored as (in, out) so the kernel does x @ W + b
        w = jax.random.uniform(kw, (fan_in, fan_out), jnp.float32,
                               minval=-bound, maxval=bound)
        b = jax.random.uniform(kb, (1, fan_out), jnp.float32,
                               minval=-bound, maxval=bound)
        return w, b

    w_in, b_in = linear(ks[0], ks[1], d_in, h)
    w_mid, b_mid = linear(ks[2], ks[3], h, h)
    w_out, b_out = linear(ks[4], ks[5], h, d_out)
    return (w_in, b_in, w_mid, b_mid, w_out, b_out)


def prepare_kernel_params(params, d_out_pad=LANE):
    """bf16 weights for the MXU; output layer zero-padded to lane-dense width."""
    w_in, b_in, w_mid, b_mid, w_out, b_out = params
    pad = d_out_pad - w_out.shape[1]
    w_out_p = jnp.pad(w_out, ((0, 0), (0, pad)))
    b_out_p = jnp.pad(b_out, ((0, 0), (0, pad)))
    return (w_in.astype(jnp.bfloat16), b_in,
            w_mid.astype(jnp.bfloat16), b_mid,
            w_out_p.astype(jnp.bfloat16), b_out_p)


def reference_forward_f32(x, params, n_mid):
    """True f32 forward (PyTorch semantics)."""
    w_in, b_in, w_mid, b_mid, w_out, b_out = params
    h = jnp.maximum(x @ w_in + b_in, 0.0)
    for _ in range(n_mid):
        h = jnp.maximum(h @ w_mid + b_mid, 0.0)
    return h @ w_out + b_out


def reference_forward_mixed(x, params, n_mid):
    """Same mixed precision as the kernel: bf16 MXU inputs, f32 accumulation."""
    w_in, b_in, w_mid, b_mid, w_out, b_out = params

    def mm(a, w):
        return jnp.dot(a.astype(jnp.bfloat16), w.astype(jnp.bfloat16),
                       preferred_element_type=jnp.float32)

    h = jnp.maximum(mm(x, w_in) + b_in, 0.0)
    for _ in range(n_mid):
        h = jnp.maximum(mm(h, w_mid) + b_mid, 0.0)
    return mm(h, w_out) + b_out


if __name__ == "__main__":
    # Small but TPU-aligned shapes: batch tiled over a 1-D grid of 2 tiles.
    N, D_in, H, D_out = 256, 128, 256, 32
    TM = 128

    key = jax.random.PRNGKey(0)
    kx, kp = jax.random.split(key)
    x = jax.random.normal(kx, (N, D_in), dtype=jnp.float32)
    params = make_params(kp, D_in, H, D_out)
    kparams = prepare_kernel_params(params)

    # Dynamic graph choice, same semantics as the PyTorch forward
    # (Python-level randomness per call), but seeded for determinism.
    random.seed(0)
    n_mid = random.randint(0, 3)

    y = dynamic_net_forward(x, kparams, n_mid, D_out, tm=TM)
    y = jax.block_until_ready(y)

    assert y.shape == (N, D_out)

    # Tight check against a reference using the same mixed precision.
    y_mixed = reference_forward_mixed(x, params, n_mid)
    assert jnp.allclose(y, y_mixed, atol=1e-3, rtol=1e-3)

    # Loose check against the true f32 forward (bf16 MXU-input rounding only).
    y_f32 = reference_forward_f32(x, params, n_mid)
    assert jnp.allclose(y, y_f32, atol=5e-2, rtol=5e-2)

    print("KERNEL_OK")
</pallas_src>

<mosaic_0001>
module attributes {stable_mosaic.version = 11 : i64} {
  func.func @dynamicnet_kernel(%arg0: i32, %arg1: memref<1xi32, #tpu.memory_space<smem>>, %arg2: memref<128x128xbf16, #tpu.memory_space<vmem>>, %arg3: memref<128x256xbf16, #tpu.memory_space<vmem>>, %arg4: memref<1x256xf32, #tpu.memory_space<vmem>>, %arg5: memref<256x256xbf16, #tpu.memory_space<vmem>>, %arg6: memref<1x256xf32, #tpu.memory_space<vmem>>, %arg7: memref<256x128xbf16, #tpu.memory_space<vmem>>, %arg8: memref<1x128xf32, #tpu.memory_space<vmem>>, %arg9: memref<128x128xf32, #tpu.memory_space<vmem>>) attributes {dimension_semantics = [#tpu.dimension_semantics<parallel>], iteration_bounds = array<i64: 2>, scalar_prefetch = 1 : i64, scratch_operands = 0 : i64, tpu.core_type = #tpu.core_type<tc>, window_params = [{transform_indices = @transform_0, window_bounds = array<i64: 128, 128>}, {pipeline_mode = #tpu.pipeline_mode<synchronous>, transform_indices = @transform_1, window_bounds = array<i64: 128, 256>}, {pipeline_mode = #tpu.pipeline_mode<synchronous>, transform_indices = @transform_2, window_bounds = array<i64: 1, 256>}, {pipeline_mode = #tpu.pipeline_mode<synchronous>, transform_indices = @transform_3, window_bounds = array<i64: 256, 256>}, {pipeline_mode = #tpu.pipeline_mode<synchronous>, transform_indices = @transform_4, window_bounds = array<i64: 1, 256>}, {pipeline_mode = #tpu.pipeline_mode<synchronous>, transform_indices = @transform_5, window_bounds = array<i64: 256, 128>}, {pipeline_mode = #tpu.pipeline_mode<synchronous>, transform_indices = @transform_6, window_bounds = array<i64: 1, 128>}, {transform_indices = @transform_7, window_bounds = array<i64: 128, 128>}]} {
    %c0 = arith.constant 0 : index
    %0 = memref.load %arg1[%c0] : memref<1xi32, #tpu.memory_space<smem>>
    %c0_0 = arith.constant 0 : index
    %c0_1 = arith.constant 0 : index
    %1 = vector.load %arg4[%c0_0, %c0_1] : memref<1x256xf32, #tpu.memory_space<vmem>>, vector<1x256xf32>
    %c0_2 = arith.constant 0 : index
    %c0_3 = arith.constant 0 : index
    %2 = vector.load %arg6[%c0_2, %c0_3] : memref<1x256xf32, #tpu.memory_space<vmem>>, vector<1x256xf32>
    %c0_4 = arith.constant 0 : index
    %c0_5 = arith.constant 0 : index
    %3 = vector.load %arg8[%c0_4, %c0_5] : memref<1x128xf32, #tpu.memory_space<vmem>>, vector<1x128xf32>
    %c0_6 = arith.constant 0 : index
    %c0_7 = arith.constant 0 : index
    %4 = vector.load %arg2[%c0_6, %c0_7] : memref<128x128xbf16, #tpu.memory_space<vmem>>, vector<128x128xbf16>
    %c0_8 = arith.constant 0 : index
    %c0_9 = arith.constant 0 : index
    %5 = vector.load %arg3[%c0_8, %c0_9] : memref<128x256xbf16, #tpu.memory_space<vmem>>, vector<128x256xbf16>
    %cst = arith.constant dense<0.000000e+00> : vector<128x256xf32>
    %6 = tpu.matmul %4, %5, %cst {dimension_numbers = #tpu.dot_dimension_numbers<[1], [0], [0], [1], [0, 0, 1, 1], [], []>} : vector<128x128xbf16>, vector<128x256xbf16>, vector<128x256xf32> -> vector<128x256xf32>
    %7 = vector.broadcast %1 : vector<1x256xf32> to vector<128x256xf32>
    %8 = arith.addf %6, %7 : vector<128x256xf32>
    %cst_10 = arith.constant 0.000000e+00 : f32
    %9 = vector.broadcast %cst_10 : f32 to vector<128x256xf32>
    %10 = arith.maximumf %8, %9 : vector<128x256xf32>
    %c0_i32 = arith.constant 0 : i32
    %11 = arith.subi %0, %c0_i32 : i32
    %12 = arith.addi %c0_i32, %11 : i32
    %c1_i32 = arith.constant 1 : i32
    %13 = scf.for %arg10 = %c0_i32 to %12 step %c1_i32 iter_args(%arg11 = %10) -> (vector<128x256xf32>)  : i32 {
      %20 = arith.truncf %arg11 : vector<128x256xf32> to vector<128x256xbf16>
      %c0_16 = arith.constant 0 : index
      %c0_17 = arith.constant 0 : index
      %21 = vector.load %arg5[%c0_16, %c0_17] : memref<256x256xbf16, #tpu.memory_space<vmem>>, vector<256x256xbf16>
      %cst_18 = arith.constant dense<0.000000e+00> : vector<128x256xf32>
      %22 = tpu.matmul %20, %21, %cst_18 {dimension_numbers = #tpu.dot_dimension_numbers<[1], [0], [0], [1], [0, 0, 1, 1], [], []>} : vector<128x256xbf16>, vector<256x256xbf16>, vector<128x256xf32> -> vector<128x256xf32>
      %23 = vector.broadcast %2 : vector<1x256xf32> to vector<128x256xf32>
      %24 = arith.addf %22, %23 : vector<128x256xf32>
      %cst_19 = arith.constant 0.000000e+00 : f32
      %25 = vector.broadcast %cst_19 : f32 to vector<128x256xf32>
      %26 = arith.maximumf %24, %25 : vector<128x256xf32>
      scf.yield %26 : vector<128x256xf32>
    }
    %14 = arith.truncf %13 : vector<128x256xf32> to vector<128x256xbf16>
    %c0_11 = arith.constant 0 : index
    %c0_12 = arith.constant 0 : index
    %15 = vector.load %arg7[%c0_11, %c0_12] : memref<256x128xbf16, #tpu.memory_space<vmem>>, vector<256x128xbf16>
    %cst_13 = arith.constant dense<0.000000e+00> : vector<128x128xf32>
    %16 = tpu.matmul %14, %15, %cst_13 {dimension_numbers = #tpu.dot_dimension_numbers<[1], [0], [0], [1], [0, 0, 1, 1], [], []>} : vector<128x256xbf16>, vector<256x128xbf16>, vector<128x128xf32> -> vector<128x128xf32>
    %17 = vector.broadcast %3 : vector<1x128xf32> to vector<128x128xf32>
    %18 = arith.addf %16, %17 : vector<128x128xf32>
    %c0_14 = arith.constant 0 : index
    %c0_15 = arith.constant 0 : index
    %19 = vector.load %arg9[%c0_14, %c0_15] : memref<128x128xf32, #tpu.memory_space<vmem>>, vector<128x128xf32>
    tpu.vector_store %arg9[%c0_14, %c0_15], %18 {strides = array<i32>} : memref<128x128xf32, #tpu.memory_space<vmem>>, vector<128x128xf32>,
    return
  }
  func.func @transform_0(%arg0: i32, %arg1: memref<1xi32, #tpu.memory_space<smem>>) -> (i32, i32) {
    %c0_i32 = arith.constant 0 : i32
    %c0_i32_0 = arith.constant 0 : i32
    return %arg0, %c0_i32 : i32, i32
  }
  func.func @transform_1(%arg0: i32, %arg1: memref<1xi32, #tpu.memory_space<smem>>) -> (i32, i32) {
    %c0_i32 = arith.constant 0 : i32
    %c0_i32_0 = arith.constant 0 : i32
    %c0_i32_1 = arith.constant 0 : i32
    return %c0_i32, %c0_i32_0 : i32, i32
  }
  func.func @transform_2(%arg0: i32, %arg1: memref<1xi32, #tpu.memory_space<smem>>) -> (i32, i32) {
    %c0_i32 = arith.constant 0 : i32
    %c0_i32_0 = arith.constant 0 : i32
    %c0_i32_1 = arith.constant 0 : i32
    return %c0_i32, %c0_i32_0 : i32, i32
  }
  func.func @transform_3(%arg0: i32, %arg1: memref<1xi32, #tpu.memory_space<smem>>) -> (i32, i32) {
    %c0_i32 = arith.constant 0 : i32
    %c0_i32_0 = arith.constant 0 : i32
    %c0_i32_1 = arith.constant 0 : i32
    return %c0_i32, %c0_i32_0 : i32, i32
  }
  func.func @transform_4(%arg0: i32, %arg1: memref<1xi32, #tpu.memory_space<smem>>) -> (i32, i32) {
    %c0_i32 = arith.constant 0 : i32
    %c0_i32_0 = arith.constant 0 : i32
    %c0_i32_1 = arith.constant 0 : i32
    return %c0_i32, %c0_i32_0 : i32, i32
  }
  func.func @transform_5(%arg0: i32, %arg1: memref<1xi32, #tpu.memory_space<smem>>) -> (i32, i32) {
    %c0_i32 = arith.constant 0 : i32
    %c0_i32_0 = arith.constant 0 : i32
    %c0_i32_1 = arith.constant 0 : i32
    return %c0_i32, %c0_i32_0 : i32, i32
  }
  func.func @transform_6(%arg0: i32, %arg1: memref<1xi32, #tpu.memory_space<smem>>) -> (i32, i32) {
    %c0_i32 = arith.constant 0 : i32
    %c0_i32_0 = arith.constant 0 : i32
    %c0_i32_1 = arith.constant 0 : i32
    return %c0_i32, %c0_i32_0 : i32, i32
  }
  func.func @transform_7(%arg0: i32, %arg1: memref<1xi32, #tpu.memory_space<smem>>) -> (i32, i32) {
    %c0_i32 = arith.constant 0 : i32
    %c0_i32_0 = arith.constant 0 : i32
    return %arg0, %c0_i32 : i32, i32
  }
}

</mosaic_0001>

<llo_original>
// kernel: tpu_custom_call.1
$region0: #{tpu_custom_call.1}
  #allocation0 [shape = 'u32[]', space=smem, size = 0x4, offset = 0x4, fixed_abs, tag = 'smem constant byte address 0x4 - core index']
  #allocation1 [shape = 'u32[144,128]{1,0:T(1,128)}', space=vmem, size = 0x12000, scoped, tag = 'internal scratch']
  #allocation2 [shape = 's32[1]{0}', space=sflag, size = 0x4, scoped, tag = 'scoped memory for tpu_custom_call.1']
  #allocation3 [shape = 's32[1]{0:T(128)S(6)}', space=smem, size = 0x200, scoped, tag = 'prefetched SMEM operand 0']
  %s0 = inlined_call_operand.<no memory space> [shape: s32[1], index: 0, kind: input, shape index: {}]
  %s1 = inlined_call_operand.hbm [shape: bf16[256,128], index: 1, kind: input, shape index: {}]
  %s2 = inlined_call_operand.hbm [shape: bf16[128,256], index: 2, kind: input, shape index: {}]
  %s3 = inlined_call_operand.vmem [shape: f32[1,256], index: 3, kind: input, shape index: {}]
  %s4 = inlined_call_operand.hbm [shape: bf16[256,256], index: 4, kind: input, shape index: {}]
  %s5 = inlined_call_operand.vmem [shape: f32[1,256], index: 5, kind: input, shape index: {}]
  %s6 = inlined_call_operand.hbm [shape: bf16[256,128], index: 6, kind: input, shape index: {}]
  %s7 = inlined_call_operand.vmem [shape: f32[1,128], index: 7, kind: input, shape index: {}]
  %s8 = inlined_call_operand.hbm [shape: f32[256,128], index: 8, kind: output, shape index: {}]
  %s9 = sld [smem:[#allocation0]]
  $region84: #{tpu_custom_call.1} parent=0
    _
  %s11 = ssub.s32 1, %s9
  %s12 = scalar_select 0, %s11, %s9
  %13 = sst [smem:[#allocation3]] %s0
  $region1: #{tpu_custom_call.1} parent=0
    #allocation4 [shape = 'u8[65536]{0}', space=vmem, size = 0x10000, scoped, tag = 'input window, operand 1']
    #allocation5 [shape = 's32[2]{0}', space=sflag, size = 0x8, scoped, tag = 'scoped memory for tpu_custom_call.1']
    #allocation6 [shape = 's32[2]{0}', space=sflag, size = 0x8, scoped, tag = 'scoped memory for tpu_custom_call.1']
    #allocation7 [shape = 'u8[65536]{0}', space=vmem, size = 0x10000, scoped, tag = 'input window, operand 2, single buffered']
    #allocation8 [shape = 's32[1]{0}', space=sflag, size = 0x4, scoped, tag = 'scoped memory for tpu_custom_call.1']
    #allocation9 [shape = 'u8[131072]{0}', space=vmem, size = 0x20000, scoped, tag = 'input window, operand 4, single buffered']
    #allocation10 [shape = 'u8[65536]{0}', space=vmem, size = 0x10000, scoped, tag = 'input window, operand 6, single buffered']
    #allocation11 [shape = 's32[1]{0}', space=sflag, size = 0x4, scoped, tag = 'scoped memory for tpu_custom_call.1']
    #allocation12 [shape = 'u8[131072]{0}', space=vmem, size = 0x20000, scoped, tag = 'output window, operand 0']
    %14 = vsyncpa [#allocation5], 0
    %s15 = scalar_lea.sflag [#allocation5], 1
    %16 = vsyncpa %s15, 0
    %17 = vsyncpa [#allocation8], 0
    %18 = vsyncpa [#allocation11], 0
    %19 = vsyncpa [#allocation6], 0
    %s20 = scalar_lea.sflag [#allocation6], 1
    %21 = vsyncpa %s20, 0
    loop: start=0, step=1, limit=4
    $region2: #{tpu_custom_call.1} parent=1 // loop_pre_header
      _
    $region3: #{tpu_custom_call.1} parent=1 // loop_header
      %s23 = sphi 0, %s27
      %p24 = scmp.ge.s32.totalorder %s23, 4
      %s33 = sphi 0, %s35
      %s36 = sphi 0, %s33
      %s37 = sphi 0, %s36
      %s53 = sphi 0, %s37
      %s57 = sphi 0, %s57
      %s59 = sphi 0, %s57
      %s60 = sphi 0, %s59
      %s74 = sphi 0, %s60
      %s78 = sphi 0, %s78
      %s80 = sphi 0, %s78
      %s81 = sphi 0, %s80
      %s95 = sphi 0, %s81
      %s99 = sphi 0, %s99
      %s101 = sphi 0, %s99
      %s102 = sphi 0, %s101
      %s116 = sphi 0, %s102
      %s120 = sphi 0, %s120
      %s122 = sphi 0, %s120
      %s123 = sphi 0, %s122
      %s137 = sphi 0, %s123
      %s141 = sphi 0, %s141
      %s143 = sphi 0, %s141
      %s144 = sphi 0, %s143
      %s158 = sphi 0, %s144
      %s162 = sphi 0, %s162
      %s164 = sphi 0, %s162
      %s165 = sphi 0, %s164
      %s179 = sphi 0, %s165
      %s185 = sphi 0, %s187
      %s188 = sphi 0, %s185
      %s189 = sphi 0, %s188
      %s205 = sphi 0, %s189
    $region4: #{tpu_custom_call.1} parent=1 // loop_header_branch
      %26 = sbr.rel (%p24) target = $region8
    $region5: #{tpu_custom_call.1} parent=1 // loop_body
      %s28 = ssub.s32 %s23, 1
      %s29 = ssub.s32 %s23, 2
      %s30 = sadd.s32 %s23, 1
      %s31 = ssub.s32 %s23, %s30
      %p32 = scmp.eq.s32.totalorder %s31, 0
      %s34 = sadd.s32 %s33, 1
      %s35 = scalar_select %p32, %s33, %s34
      %p38 = pneg %p32
      %p39 = scmp.eq.s32.totalorder %s23, 1
      %p40 = por %p38, %p39
      %p41 = scmp.ne.s32.totalorder %s33, %s36
      %p42 = scmp.eq.s32.totalorder %s23, 0
      %p43 = por %p41, %p42
      %p44 = scmp.ne.s32.totalorder %s33, %s36
      %p45 = scmp.eq.s32.totalorder %s28, 1
      %p46 = por %p44, %p45
      %p47 = scmp.ne.s32.totalorder %s36, %s37
      %p48 = scmp.eq.s32.totalorder %s28, 0
      %p49 = por %p47, %p48
      %p50 = scmp.ne.s32.totalorder %s36, %s37
      %p51 = scmp.eq.s32.totalorder %s29, 1
      %p52 = por %p50, %p51
      %p54 = scmp.ne.s32.totalorder %s37, %s53
      %p55 = scmp.eq.s32.totalorder %s29, 0
      %p56 = por %p54, %p55
      %s58 = sadd.s32 %s57, 1
      %p61 = scmp.eq.s32.totalorder %s23, 1
      %p62 = scmp.ne.s32.totalorder %s57, %s59
      %p63 = scmp.eq.s32.totalorder %s23, 0
      %p64 = por %p62, %p63
      %p65 = scmp.ne.s32.totalorder %s57, %s59
      %p66 = scmp.eq.s32.totalorder %s28, 1
      %p67 = por %p65, %p66
      %p68 = scmp.ne.s32.totalorder %s59, %s60
      %p69 = scmp.eq.s32.totalorder %s28, 0
      %p70 = por %p68, %p69
      %p71 = scmp.ne.s32.totalorder %s59, %s60
      %p72 = scmp.eq.s32.totalorder %s29, 1
      %p73 = por %p71, %p72
      %p75 = scmp.ne.s32.totalorder %s60, %s74
      %p76 = scmp.eq.s32.totalorder %s29, 0
      %p77 = por %p75, %p76
      %s79 = sadd.s32 %s78, 1
      %p82 = scmp.eq.s32.totalorder %s23, 1
      %p83 = scmp.ne.s32.totalorder %s78, %s80
      %p84 = scmp.eq.s32.totalorder %s23, 0
      %p85 = por %p83, %p84
      %p86 = scmp.ne.s32.totalorder %s78, %s80
      %p87 = scmp.eq.s32.totalorder %s28, 1
      %p88 = por %p86, %p87
      %p89 = scmp.ne.s32.totalorder %s80, %s81
      %p90 = scmp.eq.s32.totalorder %s28, 0
      %p91 = por %p89, %p90
      %p92 = scmp.ne.s32.totalorder %s80, %s81
      %p93 = scmp.eq.s32.totalorder %s29, 1
      %p94 = por %p92, %p93
      %p96 = scmp.ne.s32.totalorder %s81, %s95
      %p97 = scmp.eq.s32.totalorder %s29, 0
      %p98 = por %p96, %p97
      %s100 = sadd.s32 %s99, 1
      %p103 = scmp.eq.s32.totalorder %s23, 1
      %p104 = scmp.ne.s32.totalorder %s99, %s101
      %p105 = scmp.eq.s32.totalorder %s23, 0
      %p106 = por %p104, %p105
      %p107 = scmp.ne.s32.totalorder %s99, %s101
      %p108 = scmp.eq.s32.totalorder %s28, 1
      %p109 = por %p107, %p108
      %p110 = scmp.ne.s32.totalorder %s101, %s102
      %p111 = scmp.eq.s32.totalorder %s28, 0
      %p112 = por %p110, %p111
      %p113 = scmp.ne.s32.totalorder %s101, %s102
      %p114 = scmp.eq.s32.totalorder %s29, 1
      %p115 = por %p113, %p114
      %p117 = scmp.ne.s32.totalorder %s102, %s116
      %p118 = scmp.eq.s32.totalorder %s29, 0
      %p119 = por %p117, %p118
      %s121 = sadd.s32 %s120, 1
      %p124 = scmp.eq.s32.totalorder %s23, 1
      %p125 = scmp.ne.s32.totalorder %s120, %s122
      %p126 = scmp.eq.s32.totalorder %s23, 0
      %p127 = por %p125, %p126
      %p128 = scmp.ne.s32.totalorder %s120, %s122
      %p129 = scmp.eq.s32.totalorder %s28, 1
      %p130 = por %p128, %p129
      %p131 = scmp.ne.s32.totalorder %s122, %s123
      %p132 = scmp.eq.s32.totalorder %s28, 0
      %p133 = por %p131, %p132
      %p134 = scmp.ne.s32.totalorder %s122, %s123
      %p135 = scmp.eq.s32.totalorder %s29, 1
      %p136 = por %p134, %p135
      %p138 = scmp.ne.s32.totalorder %s123, %s137
      %p139 = scmp.eq.s32.totalorder %s29, 0
      %p140 = por %p138, %p139
      %s142 = sadd.s32 %s141, 1
      %p145 = scmp.eq.s32.totalorder %s23, 1
      %p146 = scmp.ne.s32.totalorder %s141, %s143
      %p147 = scmp.eq.s32.totalorder %s23, 0
      %p148 = por %p146, %p147
      %p149 = scmp.ne.s32.totalorder %s141, %s143
      %p150 = scmp.eq.s32.totalorder %s28, 1
      %p151 = por %p149, %p150
      %p152 = scmp.ne.s32.totalorder %s143, %s144
      %p153 = scmp.eq.s32.totalorder %s28, 0
      %p154 = por %p152, %p153
      %p155 = scmp.ne.s32.totalorder %s143, %s144
      %p156 = scmp.eq.s32.totalorder %s29, 1
      %p157 = por %p155, %p156
      %p159 = scmp.ne.s32.totalorder %s144, %s158
      %p160 = scmp.eq.s32.totalorder %s29, 0
      %p161 = por %p159, %p160
      %s163 = sadd.s32 %s162, 1
      %p166 = scmp.eq.s32.totalorder %s23, 1
      %p167 = scmp.ne.s32.totalorder %s162, %s164
      %p168 = scmp.eq.s32.totalorder %s23, 0
      %p169 = por %p167, %p168
      %p170 = scmp.ne.s32.totalorder %s162, %s164
      %p171 = scmp.eq.s32.totalorder %s28, 1
      %p172 = por %p170, %p171
      %p173 = scmp.ne.s32.totalorder %s164, %s165
      %p174 = scmp.eq.s32.totalorder %s28, 0
      %p175 = por %p173, %p174
      %p176 = scmp.ne.s32.totalorder %s164, %s165
      %p177 = scmp.eq.s32.totalorder %s29, 1
      %p178 = por %p176, %p177
      %p180 = scmp.ne.s32.totalorder %s165, %s179
      %p181 = scmp.eq.s32.totalorder %s29, 0
      %p182 = por %p180, %p181
      %s183 = ssub.s32 %s23, %s30
      %p184 = scmp.eq.s32.totalorder %s183, 0
      %s186 = sadd.s32 %s185, 1
      %s187 = scalar_select %p184, %s185, %s186
      %p190 = pneg %p184
      %p191 = scmp.eq.s32.totalorder %s23, 1
      %p192 = por %p190, %p191
      %p193 = scmp.ne.s32.totalorder %s185, %s188
      %p194 = scmp.eq.s32.totalorder %s23, 0
      %p195 = por %p193, %p194
      %p196 = scmp.ne.s32.totalorder %s185, %s188
      %p197 = scmp.eq.s32.totalorder %s28, 1
      %p198 = por %p196, %p197
      %p199 = scmp.ne.s32.totalorder %s188, %s189
      %p200 = scmp.eq.s32.totalorder %s28, 0
      %p201 = por %p199, %p200
      %p202 = scmp.ne.s32.totalorder %s188, %s189
      %p203 = scmp.eq.s32.totalorder %s29, 1
      %p204 = por %p202, %p203
      %p206 = scmp.ne.s32.totalorder %s189, %s205
      %p207 = scmp.eq.s32.totalorder %s29, 0
      %p208 = por %p206, %p207
      %p209 = scmp.le.s32.totalorder 1, %s23
      %p210 = scmp.lt.s32.totalorder %s23, 3
      %p211 = pnand %p209, %p210
      %p212 = pneg %p211
      // Predicated region
      $region9: #{tpu_custom_call.1} parent=5 // pred_check
        _
      $region10: #{tpu_custom_call.1} parent=5 // pred_check_branch
        %214 = sbr.rel (%p211) target = $region12
      $region11: #{tpu_custom_call.1} parent=5 // pred_region
        %s215 = ssub.s32 %s23, 1
        // Predicated region
        $region13: #{tpu_custom_call.1} parent=11 // pred_check
          %p216 = pneg %p70
        $region14: #{tpu_custom_call.1} parent=11 // pred_check_branch
          %218 = sbr.rel (%p216) target = $region16
        $region15: #{tpu_custom_call.1} parent=11 // pred_region
          %s220 = ssub.s32 2048, 2048
          %221 = vsyncadd [#allocation8], %s220
          %s222 = sshll.u32 [#allocation7], 4
          %s223 = int_to_ptr.vmem [resolvable:$true] %s222
          %228 = dma.hbm_to_vmem [thread:$0]  %s2, 2048, %s223, [#allocation8], 128, 128, 8
        $region16: #{tpu_custom_call.1} parent=11 // pred_fallthru
          _
        // Predicated region
        $region17: #{tpu_custom_call.1} parent=11 // pred_check
          %p229 = pneg %p91
        $region18: #{tpu_custom_call.1} parent=11 // pred_check_branch
          %231 = sbr.rel (%p229) target = $region20
        $region19: #{tpu_custom_call.1} parent=11 // pred_region
          _
        $region20: #{tpu_custom_call.1} parent=11 // pred_fallthru
          _
        // Predicated region
        $region21: #{tpu_custom_call.1} parent=11 // pred_check
          %p232 = pneg %p112
        $region22: #{tpu_custom_call.1} parent=11 // pred_check_branch
          %234 = sbr.rel (%p232) target = $region24
        $region23: #{tpu_custom_call.1} parent=11 // pred_region
          %s236 = ssub.s32 4096, 4096
          %237 = vsyncadd [#allocation8], %s236
          %s238 = sshll.u32 [#allocation9], 4
          %s239 = int_to_ptr.vmem [resolvable:$true] %s238
          %244 = dma.hbm_to_vmem [thread:$0]  %s4, 4096, %s239, [#allocation8], 128, 128, 8
        $region24: #{tpu_custom_call.1} parent=11 // pred_fallthru
          _
        // Predicated region
        $region25: #{tpu_custom_call.1} parent=11 // pred_check
          %p245 = pneg %p133
        $region26: #{tpu_custom_call.1} parent=11 // pred_check_branch
          %247 = sbr.rel (%p245) target = $region28
        $region27: #{tpu_custom_call.1} parent=11 // pred_region
          _
        $region28: #{tpu_custom_call.1} parent=11 // pred_fallthru
          _
        // Predicated region
        $region29: #{tpu_custom_call.1} parent=11 // pred_check
          %p248 = pneg %p154
        $region30: #{tpu_custom_call.1} parent=11 // pred_check_branch
          %250 = sbr.rel (%p248) target = $region32
        $region31: #{tpu_custom_call.1} parent=11 // pred_region
          %s252 = ssub.s32 2048, 2048
          %253 = vsyncadd [#allocation11], %s252
          %s254 = sshll.u32 [#allocation10], 4
          %s255 = int_to_ptr.vmem [resolvable:$true] %s254
          %260 = dma.hbm_to_vmem [thread:$0]  %s6, 2048, %s255, [#allocation11], 64, 64, 4
        $region32: #{tpu_custom_call.1} parent=11 // pred_fallthru
          _
        // Predicated region
        $region33: #{tpu_custom_call.1} parent=11 // pred_check
          %p261 = pneg %p175
        $region34: #{tpu_custom_call.1} parent=11 // pred_check_branch
          %263 = sbr.rel (%p261) target = $region36
        $region35: #{tpu_custom_call.1} parent=11 // pred_region
          _
        $region36: #{tpu_custom_call.1} parent=11 // pred_fallthru
          _
      $region12: #{tpu_custom_call.1} parent=5 // pred_fallthru
        _
      %p264 = scmp.lt.s32.totalorder %s23, 2
      // Predicated region
      $region37: #{tpu_custom_call.1} parent=5 // pred_check
        %p265 = pneg %p264
      $region38: #{tpu_custom_call.1} parent=5 // pred_check_branch
        %267 = sbr.rel (%p265) target = $region40
      $region39: #{tpu_custom_call.1} parent=5 // pred_region
        // Predicated region
        $region41: #{tpu_custom_call.1} parent=39 // pred_check
          %p268 = pneg %p43
        $region42: #{tpu_custom_call.1} parent=39 // pred_check_branch
          %270 = sbr.rel (%p268) target = $region44
        $region43: #{tpu_custom_call.1} parent=39 // pred_region
          %s271 = sand.u32 %s33, 1
          %s272 = scalar_lea.sflag [#allocation5], %s271
          %s273 = sand.u32 %s33, 1
          %s274 = smul.addr %s273, 64
          %s275 = scalar_lea.vmem [#allocation4], %s274
          %s276 = smul.u32 16, %s23
          %s278 = ssub.s32 1024, 1024
          %279 = vsyncadd %s272, %s278
          %s280 = smul.addr %s276, 64
          %s281 = scalar_lea.hbm %s1, %s280
          %s282 = sshll.u32 %s275, 4
          %s283 = int_to_ptr.vmem [resolvable:$true] %s282
          %288 = dma.hbm_to_vmem [thread:$0]  %s281, 1024, %s283, %s272, 64, 64, 4
        $region44: #{tpu_custom_call.1} parent=39 // pred_fallthru
          _
      $region40: #{tpu_custom_call.1} parent=5 // pred_fallthru
        _
      %p289 = scmp.le.s32.totalorder 1, %s23
      %p290 = scmp.lt.s32.totalorder %s23, 3
      %p291 = pnand %p289, %p290
      %p292 = pneg %p291
      // Predicated region
      $region45: #{tpu_custom_call.1} parent=5 // pred_check
        _
      $region46: #{tpu_custom_call.1} parent=5 // pred_check_branch
        %294 = sbr.rel (%p291) target = $region48
      $region47: #{tpu_custom_call.1} parent=5 // pred_region
        %s295 = ssub.s32 %s23, 1
        %s296 = sand.u32 %s36, 1
        %s297 = scalar_lea.sflag [#allocation5], %s296
        %s298 = sand.u32 %s36, 1
        %s299 = smul.addr %s298, 64
        %s300 = scalar_lea.vmem [#allocation4], %s299
        // Predicated region
        $region49: #{tpu_custom_call.1} parent=47 // pred_check
          %p301 = pneg %p49
        $region50: #{tpu_custom_call.1} parent=47 // pred_check_branch
          %303 = sbr.rel (%p301) target = $region52
        $region51: #{tpu_custom_call.1} parent=47 // pred_region
          %304 = dma.done %s297, 1024
        $region52: #{tpu_custom_call.1} parent=47 // pred_fallthru
          _
        // Predicated region
        $region53: #{tpu_custom_call.1} parent=47 // pred_check
          %p305 = pneg %p70
        $region54: #{tpu_custom_call.1} parent=47 // pred_check_branch
          %307 = sbr.rel (%p305) target = $region56
        $region55: #{tpu_custom_call.1} parent=47 // pred_region
          %308 = dma.done [#allocation8], 2048
        $region56: #{tpu_custom_call.1} parent=47 // pred_fallthru
          _
        // Predicated region
        $region57: #{tpu_custom_call.1} parent=47 // pred_check
          %p309 = pneg %p112
        $region58: #{tpu_custom_call.1} parent=47 // pred_check_branch
          %311 = sbr.rel (%p309) target = $region60
        $region59: #{tpu_custom_call.1} parent=47 // pred_region
          %312 = dma.done [#allocation8], 4096
        $region60: #{tpu_custom_call.1} parent=47 // pred_fallthru
          _
        // Predicated region
        $region61: #{tpu_custom_call.1} parent=47 // pred_check
          %p313 = pneg %p154
        $region62: #{tpu_custom_call.1} parent=47 // pred_check_branch
          %315 = sbr.rel (%p313) target = $region64
        $region63: #{tpu_custom_call.1} parent=47 // pred_region
          %316 = dma.done [#allocation11], 2048
        $region64: #{tpu_custom_call.1} parent=47 // pred_fallthru
          _
        %s317 = sand.u32 %s36, 1
        %s318 = scalar_lea.sflag [#allocation5], %s317
        %s319 = sand.u32 %s36, 1
        %s320 = smul.addr %s319, 64
        %s321 = scalar_lea.vmem [#allocation4], %s320
        %p322 = pneg %p49
        %p323 = pneg %p46
        %p324 = pneg %p70
        %p325 = pneg %p67
        %p326 = pneg %p91
        %p327 = pneg %p88
        %p328 = pneg %p112
        %p329 = pneg %p109
        %p330 = pneg %p133
        %p331 = pneg %p130
        %p332 = pneg %p154
        %p333 = pneg %p151
        %p334 = pneg %p175
        %p335 = pneg %p172
        %p336 = pneg %p201
        %p337 = pneg %p198
        %s338 = sand.u32 %s188, 1
        %s339 = scalar_lea.sflag [#allocation6], %s338
        %s340 = sand.u32 %s188, 1
        %s341 = smul.addr %s340, 128
        %s342 = scalar_lea.vmem [#allocation12], %s341
        %s343 = smul.u32 16, %s28
        %s344 = smul.u32 16, %s28
        %s346 = sld [smem:[#allocation3]]
        %v347 = vld [vmem:[%s3] sm:$0x3]
        %v348 = vld [vmem:[%s5] sm:$0x3]
        %v349 = vld [vmem:[%s7] sm:$0x1]
        %v350 = vld [vmem:[%s300] sm:$0xf]
        %v351 = vld [vmem:[%s300 + $0x4] sm:$0xf]
        %v352 = vld [vmem:[%s300 + $0x8] sm:$0xf]
        %v353 = vld [vmem:[%s300 + $0xc] sm:$0xf]
        %v354 = vld [vmem:[%s300 + $0x10] sm:$0xf]
        %v355 = vld [vmem:[%s300 + $0x14] sm:$0xf]
        %v356 = vld [vmem:[%s300 + $0x18] sm:$0xf]
        %v357 = vld [vmem:[%s300 + $0x1c] sm:$0xf]
        %v358 = vld [vmem:[%s300 + $0x20] sm:$0xf]
        %v359 = vld [vmem:[%s300 + $0x24] sm:$0xf]
        %v360 = vld [vmem:[%s300 + $0x28] sm:$0xf]
        %v361 = vld [vmem:[%s300 + $0x2c] sm:$0xf]
        %v362 = vld [vmem:[%s300 + $0x30] sm:$0xf]
        %v363 = vld [vmem:[%s300 + $0x34] sm:$0xf]
        %v364 = vld [vmem:[%s300 + $0x38] sm:$0xf]
        %v365 = vld [vmem:[%s300 + $0x3c] sm:$0xf]
        %v366 = vld [vmem:[#allocation7] sm:$0xff]
        %v367 = vld [vmem:[#allocation7 + $0x8] sm:$0xff]
        %v368 = vld [vmem:[#allocation7 + $0x10] sm:$0xff]
        %v369 = vld [vmem:[#allocation7 + $0x18] sm:$0xff]
        %v370 = vld [vmem:[#allocation7 + $0x20] sm:$0xff]
        %v371 = vld [vmem:[#allocation7 + $0x28] sm:$0xff]
        %v372 = vld [vmem:[#allocation7 + $0x30] sm:$0xff]
        %v373 = vld [vmem:[#allocation7 + $0x38] sm:$0xff]
        %v374 = vld [vmem:[#allocation7 + $0x40] sm:$0xff]
        %v375 = vld [vmem:[#allocation7 + $0x48] sm:$0xff]
        %v376 = vld [vmem:[#allocation7 + $0x50] sm:$0xff]
        %v377 = vld [vmem:[#allocation7 + $0x58] sm:$0xff]
        %v378 = vld [vmem:[#allocation7 + $0x60] sm:$0xff]
        %v379 = vld [vmem:[#allocation7 + $0x68] sm:$0xff]
        %v380 = vld [vmem:[#allocation7 + $0x70] sm:$0xff]
        %v381 = vld [vmem:[#allocation7 + $0x78] sm:$0xff]
        %v383 = vlaneseq
        %v384 = vshrl.u32 %v383, 7
        %v385 = vsub.s32 0, %v384
        %v386 = vrot.slane %v347, %v385
        %v387 = vlaneseq
        %v388 = vshrl.u32 %v387, 7
        %v389 = vsub.s32 1, %v388
        %v390 = vrot.slane %v347, %v389
        %v409 = vunpack.c.l.b16 %v350
        %v410 = vunpack.c.l.b16 %v351
        %v411 = vunpack.c.l.b16 %v352
        %v412 = vunpack.c.l.b16 %v353
        %v413 = vunpack.c.l.b16 %v354
        %v414 = vunpack.c.l.b16 %v355
        %v415 = vunpack.c.l.b16 %v356
        %v416 = vunpack.c.l.b16 %v357
        %v417 = vunpack.c.l.b16 %v358
        %v418 = vunpack.c.l.b16 %v359
        %v419 = vunpack.c.l.b16 %v360
        %v420 = vunpack.c.l.b16 %v361
        %v421 = vunpack.c.l.b16 %v362
        %v422 = vunpack.c.l.b16 %v363
        %v423 = vunpack.c.l.b16 %v364
        %v424 = vunpack.c.l.b16 %v365
        %v425 = vpack.c.b16 %v410, %v409
        %v426 = vpack.c.b16 %v412, %v411
        %v427 = vpack.c.b16 %v414, %v413
        %v428 = vpack.c.b16 %v416, %v415
        %v429 = vpack.c.b16 %v418, %v417
        %v430 = vpack.c.b16 %v420, %v419
        %v431 = vpack.c.b16 %v422, %v421
        %v432 = vpack.c.b16 %v424, %v423
        %v457 = vunpack.c.l.b16 %v366
        %v458 = vunpack.c.h.b16 %v366
        %v459 = vunpack.c.l.b16 %v367
        %v460 = vunpack.c.h.b16 %v367
        %v461 = vunpack.c.l.b16 %v368
        %v462 = vunpack.c.h.b16 %v368
        %v463 = vunpack.c.l.b16 %v369
        %v464 = vunpack.c.h.b16 %v369
        %v465 = vunpack.c.l.b16 %v370
        %v466 = vunpack.c.h.b16 %v370
        %v467 = vunpack.c.l.b16 %v371
        %v468 = vunpack.c.h.b16 %v371
        %v469 = vunpack.c.l.b16 %v372
        %v470 = vunpack.c.h.b16 %v372
        %v471 = vunpack.c.l.b16 %v373
        %v472 = vunpack.c.h.b16 %v373
        %v473 = vunpack.c.l.b16 %v374
        %v474 = vunpack.c.h.b16 %v374
        %v475 = vunpack.c.l.b16 %v375
        %v476 = vunpack.c.h.b16 %v375
        %v477 = vunpack.c.l.b16 %v376
        %v478 = vunpack.c.h.b16 %v376
        %v479 = vunpack.c.l.b16 %v377
        %v480 = vunpack.c.h.b16 %v377
        %v481 = vunpack.c.l.b16 %v378
        %v482 = vunpack.c.h.b16 %v378
        %v483 = vunpack.c.l.b16 %v379
        %v484 = vunpack.c.h.b16 %v379
        %v485 = vunpack.c.l.b16 %v380
        %v486 = vunpack.c.h.b16 %v380
        %v487 = vunpack.c.l.b16 %v381
        %v488 = vunpack.c.h.b16 %v381
        %v489 = vpack.c.b16 %v459, %v457
        %v490 = vpack.c.b16 %v460, %v458
        %v491 = vpack.c.b16 %v463, %v461
        %v492 = vpack.c.b16 %v464, %v462
        %v493 = vpack.c.b16 %v467, %v465
        %v494 = vpack.c.b16 %v468, %v466
        %v495 = vpack.c.b16 %v471, %v469
        %v496 = vpack.c.b16 %v472, %v470
        %v497 = vpack.c.b16 %v475, %v473
        %v498 = vpack.c.b16 %v476, %v474
        %v499 = vpack.c.b16 %v479, %v477
        %v500 = vpack.c.b16 %v480, %v478
        %v501 = vpack.c.b16 %v483, %v481
        %v502 = vpack.c.b16 %v484, %v482
        %v503 = vpack.c.b16 %v487, %v485
        %v504 = vpack.c.b16 %v488, %v486
        %521 = vmatprep.subr.bf16.mxu0 %v490
        %522 = vmatpush1.bf16.msra.mxu0 %v489
        %523 = vmatprep.subr.bf16.mxu0 %v492
        %524 = vmatpush1.bf16.msra.mxu0 %v491
        %525 = vmatprep.subr.bf16.mxu0 %v494
        %526 = vmatpush1.bf16.msra.mxu0 %v493
        %527 = vmatprep.subr.bf16.mxu0 %v496
        %528 = vmatpush1.bf16.msra.mxu0 %v495
        %529 = vmatprep.subr.bf16.mxu0 %v498
        %530 = vmatpush1.bf16.msra.mxu0 %v497
        %531 = vmatprep.subr.bf16.mxu0 %v500
        %532 = vmatpush1.bf16.msra.mxu0 %v499
        %533 = vmatprep.subr.bf16.mxu0 %v502
        %534 = vmatpush1.bf16.msra.mxu0 %v501
        %535 = vmatprep.subr.bf16.mxu0 %v504
        %536 = vmatpush1.bf16.msra.mxu0 %v503
        %537 = vmatprep.subr.bf16.mxu0 0
        %538 = vmatpush1.bf16.msra.mxu0 0
        %539 = vmatprep.subr.bf16.mxu0 0
        %540 = vmatpush1.bf16.msra.mxu0 0
        %541 = vmatprep.subr.bf16.mxu0 0
        %542 = vmatpush1.bf16.msra.mxu0 0
        %543 = vmatprep.subr.bf16.mxu0 0
        %544 = vmatpush1.bf16.msra.mxu0 0
        %545 = vmatprep.subr.bf16.mxu0 0
        %546 = vmatpush1.bf16.msra.mxu0 0
        %547 = vmatprep.subr.bf16.mxu0 0
        %548 = vmatpush1.bf16.msra.mxu0 0
        %549 = vmatprep.subr.bf16.mxu0 0
        %550 = vmatpush1.bf16.msra.mxu0 0
        %551 = vmatprep.subr.bf16.mxu0 0
        %552 = vmatpush1.bf16.msra.mxu0 0
        %553 = vmatprep.mubr.bf16.mxu0 0
        %554 = vmatmul.mubr.bf16.gmra.mrb[0].mxu0 %v425
        %v555 = vpop.f32.mrb[0].mxu0
        %v556 = vadd.f32 %v386, %v555
        %v557 = vpop.f32.mrb[0].mxu0
        %v558 = vadd.f32 %v390, %v557
        %v559 = vpop.f32.mrb[0].mxu0
        %v560 = vadd.f32 %v386, %v559
        %v561 = vpop.f32.mrb[0].mxu0
        %v562 = vadd.f32 %v390, %v561
        %563 = vmatprep.mubr.bf16.mxu0 0
        %564 = vmatmul.mubr.bf16.gmra.mrb[0].mxu0 %v426
        %v565 = vpop.f32.mrb[0].mxu0
        %v566 = vadd.f32 %v386, %v565
        %v567 = vpop.f32.mrb[0].mxu0
        %v568 = vadd.f32 %v390, %v567
        %v569 = vpop.f32.mrb[0].mxu0
        %v570 = vadd.f32 %v386, %v569
        %v571 = vpop.f32.mrb[0].mxu0
        %v572 = vadd.f32 %v390, %v571
        %573 = vmatprep.mubr.bf16.mxu0 0
        %574 = vmatmul.mubr.bf16.gmra.mrb[0].mxu0 %v427
        %v575 = vpop.f32.mrb[0].mxu0
        %v576 = vadd.f32 %v386, %v575
        %v577 = vpop.f32.mrb[0].mxu0
        %v578 = vadd.f32 %v390, %v577
        %v579 = vpop.f32.mrb[0].mxu0
        %v580 = vadd.f32 %v386, %v579
        %v581 = vpop.f32.mrb[0].mxu0
        %v582 = vadd.f32 %v390, %v581
        %583 = vmatprep.mubr.bf16.mxu0 0
        %584 = vmatmul.mubr.bf16.gmra.mrb[0].mxu0 %v428
        %v585 = vpop.f32.mrb[0].mxu0
        %v586 = vadd.f32 %v386, %v585
        %v587 = vpop.f32.mrb[0].mxu0
        %v588 = vadd.f32 %v390, %v587
        %v589 = vpop.f32.mrb[0].mxu0
        %v590 = vadd.f32 %v386, %v589
        %v591 = vpop.f32.mrb[0].mxu0
        %v592 = vadd.f32 %v390, %v591
        %593 = vmatprep.mubr.bf16.mxu0 0
        %594 = vmatmul.mubr.bf16.gmra.mrb[0].mxu0 %v429
        %v595 = vpop.f32.mrb[0].mxu0
        %v596 = vadd.f32 %v386, %v595
        %v597 = vpop.f32.mrb[0].mxu0
        %v598 = vadd.f32 %v390, %v597
        %v599 = vpop.f32.mrb[0].mxu0
        %v600 = vadd.f32 %v386, %v599
        %v601 = vpop.f32.mrb[0].mxu0
        %v602 = vadd.f32 %v390, %v601
        %603 = vmatprep.mubr.bf16.mxu0 0
        %604 = vmatmul.mubr.bf16.gmra.mrb[0].mxu0 %v430
        %v605 = vpop.f32.mrb[0].mxu0
        %v606 = vadd.f32 %v386, %v605
        %v607 = vpop.f32.mrb[0].mxu0
        %v608 = vadd.f32 %v390, %v607
        %v609 = vpop.f32.mrb[0].mxu0
        %v610 = vadd.f32 %v386, %v609
        %v611 = vpop.f32.mrb[0].mxu0
        %v612 = vadd.f32 %v390, %v611
        %613 = vmatprep.mubr.bf16.mxu0 0
        %614 = vmatmul.mubr.bf16.gmra.mrb[0].mxu0 %v431
        %v615 = vpop.f32.mrb[0].mxu0
        %v616 = vadd.f32 %v386, %v615
        %v617 = vpop.f32.mrb[0].mxu0
        %v618 = vadd.f32 %v390, %v617
        %v619 = vpop.f32.mrb[0].mxu0
        %v620 = vadd.f32 %v386, %v619
        %v621 = vpop.f32.mrb[0].mxu0
        %v622 = vadd.f32 %v390, %v621
        %623 = vmatprep.mubr.bf16.mxu0 0
        %624 = vmatmul.mubr.bf16.gmra.mrb[0].mxu0 %v432
        %v625 = vpop.f32.mrb[0].mxu0
        %v626 = vadd.f32 %v386, %v625
        %v627 = vpop.f32.mrb[0].mxu0
        %v628 = vadd.f32 %v390, %v627
        %v629 = vpop.f32.mrb[0].mxu0
        %v630 = vadd.f32 %v386, %v629
        %v631 = vpop.f32.mrb[0].mxu0
        %v632 = vadd.f32 %v390, %v631
        %633 = vdwg.mxu0
        %v634 = vmax.f32 %v556, 0.0
        %v635 = vmax.f32 %v558, 0.0
        %v636 = vmax.f32 %v560, 0.0
        %v637 = vmax.f32 %v562, 0.0
        %v638 = vmax.f32 %v566, 0.0
        %v639 = vmax.f32 %v568, 0.0
        %v640 = vmax.f32 %v570, 0.0
        %v641 = vmax.f32 %v572, 0.0
        %v642 = vmax.f32 %v576, 0.0
        %v643 = vmax.f32 %v578, 0.0
        %v644 = vmax.f32 %v580, 0.0
        %v645 = vmax.f32 %v582, 0.0
        %v646 = vmax.f32 %v586, 0.0
        %v647 = vmax.f32 %v588, 0.0
        %v648 = vmax.f32 %v590, 0.0
        %v649 = vmax.f32 %v592, 0.0
        %v650 = vmax.f32 %v596, 0.0
        %v651 = vmax.f32 %v598, 0.0
        %v652 = vmax.f32 %v600, 0.0
        %v653 = vmax.f32 %v602, 0.0
        %v654 = vmax.f32 %v606, 0.0
        %v655 = vmax.f32 %v608, 0.0
        %v656 = vmax.f32 %v610, 0.0
        %v657 = vmax.f32 %v612, 0.0
        %v658 = vmax.f32 %v616, 0.0
        %v659 = vmax.f32 %v618, 0.0
        %v660 = vmax.f32 %v620, 0.0
        %v661 = vmax.f32 %v622, 0.0
        %v662 = vmax.f32 %v626, 0.0
        %v663 = vmax.f32 %v628, 0.0
        %v664 = vmax.f32 %v630, 0.0
        %v665 = vmax.f32 %v632, 0.0
        // While loop
        $region65: #{tpu_custom_call.1} parent=47 // loop_pre_header
          _
        $region66: #{tpu_custom_call.1} parent=47 // loop_header
          %s667 = sphi 0, %s669
          %p668 = scmp.ge.s32.totalorder %s667, %s346
          %v672 = vphi %v634, %v1036
          %v673 = vphi %v635, %v1037
          %v674 = vphi %v636, %v1038
          %v675 = vphi %v637, %v1039
          %v676 = vphi %v638, %v1040
          %v677 = vphi %v639, %v1041
          %v678 = vphi %v640, %v1042
          %v679 = vphi %v641, %v1043
          %v680 = vphi %v642, %v1044
          %v681 = vphi %v643, %v1045
          %v682 = vphi %v644, %v1046
          %v683 = vphi %v645, %v1047
          %v684 = vphi %v646, %v1048
          %v685 = vphi %v647, %v1049
          %v686 = vphi %v648, %v1050
          %v687 = vphi %v649, %v1051
          %v688 = vphi %v650, %v1052
          %v689 = vphi %v651, %v1053
          %v690 = vphi %v652, %v1054
          %v691 = vphi %v653, %v1055
          %v692 = vphi %v654, %v1056
          %v693 = vphi %v655, %v1057
          %v694 = vphi %v656, %v1058
          %v695 = vphi %v657, %v1059
          %v696 = vphi %v658, %v1060
          %v697 = vphi %v659, %v1061
          %v698 = vphi %v660, %v1062
          %v699 = vphi %v661, %v1063
          %v700 = vphi %v662, %v1064
          %v701 = vphi %v663, %v1065
          %v702 = vphi %v664, %v1066
          %v703 = vphi %v665, %v1067
        $region67: #{tpu_custom_call.1} parent=47 // loop_header_branch
          %671 = sbr.rel (%p668) target = $region71
        $region68: #{tpu_custom_call.1} parent=47 // loop_body
          %v704 = vpack.c.bf16 %v674, %v672
          %v705 = vpack.c.bf16 %v675, %v673
          %v706 = vpack.c.bf16 %v678, %v676
          %v707 = vpack.c.bf16 %v679, %v677
          %v708 = vpack.c.bf16 %v682, %v680
          %v709 = vpack.c.bf16 %v683, %v681
          %v710 = vpack.c.bf16 %v686, %v684
          %v711 = vpack.c.bf16 %v687, %v685
          %v712 = vpack.c.bf16 %v690, %v688
          %v713 = vpack.c.bf16 %v691, %v689
          %v714 = vpack.c.bf16 %v694, %v692
          %v715 = vpack.c.bf16 %v695, %v693
          %v716 = vpack.c.bf16 %v698, %v696
          %v717 = vpack.c.bf16 %v699, %v697
          %v718 = vpack.c.bf16 %v702, %v700
          %v719 = vpack.c.bf16 %v703, %v701
          %v720 = vld [vmem:[#allocation9] sm:$0xff]
          %v721 = vld [vmem:[#allocation9 + $0x8] sm:$0xff]
          %v722 = vld [vmem:[#allocation9 + $0x10] sm:$0xff]
          %v723 = vld [vmem:[#allocation9 + $0x18] sm:$0xff]
          %v724 = vld [vmem:[#allocation9 + $0x20] sm:$0xff]
          %v725 = vld [vmem:[#allocation9 + $0x28] sm:$0xff]
          %v726 = vld [vmem:[#allocation9 + $0x30] sm:$0xff]
          %v727 = vld [vmem:[#allocation9 + $0x38] sm:$0xff]
          %v728 = vld [vmem:[#allocation9 + $0x40] sm:$0xff]
          %v729 = vld [vmem:[#allocation9 + $0x48] sm:$0xff]
          %v730 = vld [vmem:[#allocation9 + $0x50] sm:$0xff]
          %v731 = vld [vmem:[#allocation9 + $0x58] sm:$0xff]
          %v732 = vld [vmem:[#allocation9 + $0x60] sm:$0xff]
          %v733 = vld [vmem:[#allocation9 + $0x68] sm:$0xff]
          %v734 = vld [vmem:[#allocation9 + $0x70] sm:$0xff]
          %v735 = vld [vmem:[#allocation9 + $0x78] sm:$0xff]
          %v736 = vld [vmem:[#allocation9 + $0x80] sm:$0xff]
          %v737 = vld [vmem:[#allocation9 + $0x88] sm:$0xff]
          %v738 = vld [vmem:[#allocation9 + $0x90] sm:$0xff]
          %v739 = vld [vmem:[#allocation9 + $0x98] sm:$0xff]
          %v740 = vld [vmem:[#allocation9 + $0xa0] sm:$0xff]
          %v741 = vld [vmem:[#allocation9 + $0xa8] sm:$0xff]
          %v742 = vld [vmem:[#allocation9 + $0xb0] sm:$0xff]
          %v743 = vld [vmem:[#allocation9 + $0xb8] sm:$0xff]
          %v744 = vld [vmem:[#allocation9 + $0xc0] sm:$0xff]
          %v745 = vld [vmem:[#allocation9 + $0xc8] sm:$0xff]
          %v746 = vld [vmem:[#allocation9 + $0xd0] sm:$0xff]
          %v747 = vld [vmem:[#allocation9 + $0xd8] sm:$0xff]
          %v748 = vld [vmem:[#allocation9 + $0xe0] sm:$0xff]
          %v749 = vld [vmem:[#allocation9 + $0xe8] sm:$0xff]
          %v750 = vld [vmem:[#allocation9 + $0xf0] sm:$0xff]
          %v751 = vld [vmem:[#allocation9 + $0xf8] sm:$0xff]
          %v753 = vlaneseq
          %v754 = vshrl.u32 %v753, 7
          %v755 = vsub.s32 0, %v754
          %v756 = vrot.slane %v348, %v755
          %v757 = vlaneseq
          %v758 = vshrl.u32 %v757, 7
          %v759 = vsub.s32 1, %v758
          %v760 = vrot.slane %v348, %v759
          %v795 = vunpack.c.l.b16 %v720
          %v796 = vunpack.c.h.b16 %v720
          %v797 = vunpack.c.l.b16 %v721
          %v798 = vunpack.c.h.b16 %v721
          %v799 = vunpack.c.l.b16 %v722
          %v800 = vunpack.c.h.b16 %v722
          %v801 = vunpack.c.l.b16 %v723
          %v802 = vunpack.c.h.b16 %v723
          %v803 = vunpack.c.l.b16 %v724
          %v804 = vunpack.c.h.b16 %v724
          %v805 = vunpack.c.l.b16 %v725
          %v806 = vunpack.c.h.b16 %v725
          %v807 = vunpack.c.l.b16 %v726
          %v808 = vunpack.c.h.b16 %v726
          %v809 = vunpack.c.l.b16 %v727
          %v810 = vunpack.c.h.b16 %v727
          %v811 = vunpack.c.l.b16 %v728
          %v812 = vunpack.c.h.b16 %v728
          %v813 = vunpack.c.l.b16 %v729
          %v814 = vunpack.c.h.b16 %v729
          %v815 = vunpack.c.l.b16 %v730
          %v816 = vunpack.c.h.b16 %v730
          %v817 = vunpack.c.l.b16 %v731
          %v818 = vunpack.c.h.b16 %v731
          %v819 = vunpack.c.l.b16 %v732
          %v820 = vunpack.c.h.b16 %v732
          %v821 = vunpack.c.l.b16 %v733
          %v822 = vunpack.c.h.b16 %v733
          %v823 = vunpack.c.l.b16 %v734
          %v824 = vunpack.c.h.b16 %v734
          %v825 = vunpack.c.l.b16 %v735
          %v826 = vunpack.c.h.b16 %v735
          %v827 = vunpack.c.l.b16 %v736
          %v828 = vunpack.c.h.b16 %v736
          %v829 = vunpack.c.l.b16 %v737
          %v830 = vunpack.c.h.b16 %v737
          %v831 = vunpack.c.l.b16 %v738
          %v832 = vunpack.c.h.b16 %v738
          %v833 = vunpack.c.l.b16 %v739
          %v834 = vunpack.c.h.b16 %v739
          %v835 = vunpack.c.l.b16 %v740
          %v836 = vunpack.c.h.b16 %v740
          %v837 = vunpack.c.l.b16 %v741
          %v838 = vunpack.c.h.b16 %v741
          %v839 = vunpack.c.l.b16 %v742
          %v840 = vunpack.c.h.b16 %v742
          %v841 = vunpack.c.l.b16 %v743
          %v842 = vunpack.c.h.b16 %v743
          %v843 = vunpack.c.l.b16 %v744
          %v844 = vunpack.c.h.b16 %v744
          %v845 = vunpack.c.l.b16 %v745
          %v846 = vunpack.c.h.b16 %v745
          %v847 = vunpack.c.l.b16 %v746
          %v848 = vunpack.c.h.b16 %v746
          %v849 = vunpack.c.l.b16 %v747
          %v850 = vunpack.c.h.b16 %v747
          %v851 = vunpack.c.l.b16 %v748
          %v852 = vunpack.c.h.b16 %v748
          %v853 = vunpack.c.l.b16 %v749
          %v854 = vunpack.c.h.b16 %v749
          %v855 = vunpack.c.l.b16 %v750
          %v856 = vunpack.c.h.b16 %v750
          %v857 = vunpack.c.l.b16 %v751
          %v858 = vunpack.c.h.b16 %v751
          %v859 = vpack.c.b16 %v797, %v795
          %v860 = vpack.c.b16 %v798, %v796
          %v861 = vpack.c.b16 %v801, %v799
          %v862 = vpack.c.b16 %v802, %v800
          %v863 = vpack.c.b16 %v805, %v803
          %v864 = vpack.c.b16 %v806, %v804
          %v865 = vpack.c.b16 %v809, %v807
          %v866 = vpack.c.b16 %v810, %v808
          %v867 = vpack.c.b16 %v813, %v811
          %v868 = vpack.c.b16 %v814, %v812
          %v869 = vpack.c.b16 %v817, %v815
          %v870 = vpack.c.b16 %v818, %v816
          %v871 = vpack.c.b16 %v821, %v819
          %v872 = vpack.c.b16 %v822, %v820
          %v873 = vpack.c.b16 %v825, %v823
          %v874 = vpack.c.b16 %v826, %v824
          %v875 = vpack.c.b16 %v829, %v827
          %v876 = vpack.c.b16 %v830, %v828
          %v877 = vpack.c.b16 %v833, %v831
          %v878 = vpack.c.b16 %v834, %v832
          %v879 = vpack.c.b16 %v837, %v835
          %v880 = vpack.c.b16 %v838, %v836
          %v881 = vpack.c.b16 %v841, %v839
          %v882 = vpack.c.b16 %v842, %v840
          %v883 = vpack.c.b16 %v845, %v843
          %v884 = vpack.c.b16 %v846, %v844
          %v885 = vpack.c.b16 %v849, %v847
          %v886 = vpack.c.b16 %v850, %v848
          %v887 = vpack.c.b16 %v853, %v851
          %v888 = vpack.c.b16 %v854, %v852
          %v889 = vpack.c.b16 %v857, %v855
          %v890 = vpack.c.b16 %v858, %v856
          %923 = vmatprep.subr.bf16.mxu0 %v860
          %924 = vmatpush1.bf16.msra.mxu0 %v859
          %925 = vmatprep.subr.bf16.mxu0 %v862
          %926 = vmatpush1.bf16.msra.mxu0 %v861
          %927 = vmatprep.subr.bf16.mxu0 %v864
          %928 = vmatpush1.bf16.msra.mxu0 %v863
          %929 = vmatprep.subr.bf16.mxu0 %v866
          %930 = vmatpush1.bf16.msra.mxu0 %v865
          %931 = vmatprep.subr.bf16.mxu0 %v868
          %932 = vmatpush1.bf16.msra.mxu0 %v867
          %933 = vmatprep.subr.bf16.mxu0 %v870
          %934 = vmatpush1.bf16.msra.mxu0 %v869
          %935 = vmatprep.subr.bf16.mxu0 %v872
          %936 = vmatpush1.bf16.msra.mxu0 %v871
          %937 = vmatprep.subr.bf16.mxu0 %v874
          %938 = vmatpush1.bf16.msra.mxu0 %v873
          %939 = vmatprep.subr.bf16.mxu0 %v876
          %940 = vmatpush1.bf16.msra.mxu0 %v875
          %941 = vmatprep.subr.bf16.mxu0 %v878
          %942 = vmatpush1.bf16.msra.mxu0 %v877
          %943 = vmatprep.subr.bf16.mxu0 %v880
          %944 = vmatpush1.bf16.msra.mxu0 %v879
          %945 = vmatprep.subr.bf16.mxu0 %v882
          %946 = vmatpush1.bf16.msra.mxu0 %v881
          %947 = vmatprep.subr.bf16.mxu0 %v884
          %948 = vmatpush1.bf16.msra.mxu0 %v883
          %949 = vmatprep.subr.bf16.mxu0 %v886
          %950 = vmatpush1.bf16.msra.mxu0 %v885
          %951 = vmatprep.subr.bf16.mxu0 %v888
          %952 = vmatpush1.bf16.msra.mxu0 %v887
          %953 = vmatprep.subr.bf16.mxu0 %v890
          %954 = vmatpush1.bf16.msra.mxu0 %v889
          %955 = vmatprep.mubr.bf16.mxu0 %v705
          %956 = vmatmul.mubr.bf16.gmra.mrb[0].mxu0 %v704
          %v957 = vpop.f32.mrb[0].mxu0
          %v958 = vadd.f32 %v756, %v957
          %v959 = vpop.f32.mrb[0].mxu0
          %v960 = vadd.f32 %v760, %v959
          %v961 = vpop.f32.mrb[0].mxu0
          %v962 = vadd.f32 %v756, %v961
          %v963 = vpop.f32.mrb[0].mxu0
          %v964 = vadd.f32 %v760, %v963
          %965 = vmatprep.mubr.bf16.mxu0 %v707
          %966 = vmatmul.mubr.bf16.gmra.mrb[0].mxu0 %v706
          %v967 = vpop.f32.mrb[0].mxu0
          %v968 = vadd.f32 %v756, %v967
          %v969 = vpop.f32.mrb[0].mxu0
          %v970 = vadd.f32 %v760, %v969
          %v971 = vpop.f32.mrb[0].mxu0
          %v972 = vadd.f32 %v756, %v971
          %v973 = vpop.f32.mrb[0].mxu0
          %v974 = vadd.f32 %v760, %v973
          %975 = vmatprep.mubr.bf16.mxu0 %v709
          %976 = vmatmul.mubr.bf16.gmra.mrb[0].mxu0 %v708
          %v977 = vpop.f32.mrb[0].mxu0
          %v978 = vadd.f32 %v756, %v977
          %v979 = vpop.f32.mrb[0].mxu0
          %v980 = vadd.f32 %v760, %v979
          %v981 = vpop.f32.mrb[0].mxu0
          %v982 = vadd.f32 %v756, %v981
          %v983 = vpop.f32.mrb[0].mxu0
          %v984 = vadd.f32 %v760, %v983
          %985 = vmatprep.mubr.bf16.mxu0 %v711
          %986 = vmatmul.mubr.bf16.gmra.mrb[0].mxu0 %v710
          %v987 = vpop.f32.mrb[0].mxu0
          %v988 = vadd.f32 %v756, %v987
          %v989 = vpop.f32.mrb[0].mxu0
          %v990 = vadd.f32 %v760, %v989
          %v991 = vpop.f32.mrb[0].mxu0
          %v992 = vadd.f32 %v756, %v991
          %v993 = vpop.f32.mrb[0].mxu0
          %v994 = vadd.f32 %v760, %v993
          %995 = vmatprep.mubr.bf16.mxu0 %v713
          %996 = vmatmul.mubr.bf16.gmra.mrb[0].mxu0 %v712
          %v997 = vpop.f32.mrb[0].mxu0
          %v998 = vadd.f32 %v756, %v997
          %v999 = vpop.f32.mrb[0].mxu0
          %v1000 = vadd.f32 %v760, %v999
          %v1001 = vpop.f32.mrb[0].mxu0
          %v1002 = vadd.f32 %v756, %v1001
          %v1003 = vpop.f32.mrb[0].mxu0
          %v1004 = vadd.f32 %v760, %v1003
          %1005 = vmatprep.mubr.bf16.mxu0 %v715
          %1006 = vmatmul.mubr.bf16.gmra.mrb[0].mxu0 %v714
          %v1007 = vpop.f32.mrb[0].mxu0
          %v1008 = vadd.f32 %v756, %v1007
          %v1009 = vpop.f32.mrb[0].mxu0
          %v1010 = vadd.f32 %v760, %v1009
          %v1011 = vpop.f32.mrb[0].mxu0
          %v1012 = vadd.f32 %v756, %v1011
          %v1013 = vpop.f32.mrb[0].mxu0
          %v1014 = vadd.f32 %v760, %v1013
          %1015 = vmatprep.mubr.bf16.mxu0 %v717
          %1016 = vmatmul.mubr.bf16.gmra.mrb[0].mxu0 %v716
          %v1017 = vpop.f32.mrb[0].mxu0
          %v1018 = vadd.f32 %v756, %v1017
          %v1019 = vpop.f32.mrb[0].mxu0
          %v1020 = vadd.f32 %v760, %v1019
          %v1021 = vpop.f32.mrb[0].mxu0
          %v1022 = vadd.f32 %v756, %v1021
          %v1023 = vpop.f32.mrb[0].mxu0
          %v1024 = vadd.f32 %v760, %v1023
          %1025 = vmatprep.mubr.bf16.mxu0 %v719
          %1026 = vmatmul.mubr.bf16.gmra.mrb[0].mxu0 %v718
          %v1027 = vpop.f32.mrb[0].mxu0
          %v1028 = vadd.f32 %v756, %v1027
          %v1029 = vpop.f32.mrb[0].mxu0
          %v1030 = vadd.f32 %v760, %v1029
          %v1031 = vpop.f32.mrb[0].mxu0
          %v1032 = vadd.f32 %v756, %v1031
          %v1033 = vpop.f32.mrb[0].mxu0
          %v1034 = vadd.f32 %v760, %v1033
          %1035 = vdwg.mxu0
          %v1036 = vmax.f32 %v958, 0.0
          %v1037 = vmax.f32 %v960, 0.0
          %v1038 = vmax.f32 %v962, 0.0
          %v1039 = vmax.f32 %v964, 0.0
          %v1040 = vmax.f32 %v968, 0.0
          %v1041 = vmax.f32 %v970, 0.0
          %v1042 = vmax.f32 %v972, 0.0
          %v1043 = vmax.f32 %v974, 0.0
          %v1044 = vmax.f32 %v978, 0.0
          %v1045 = vmax.f32 %v980, 0.0
          %v1046 = vmax.f32 %v982, 0.0
          %v1047 = vmax.f32 %v984, 0.0
          %v1048 = vmax.f32 %v988, 0.0
          %v1049 = vmax.f32 %v990, 0.0
          %v1050 = vmax.f32 %v992, 0.0
          %v1051 = vmax.f32 %v994, 0.0
          %v1052 = vmax.f32 %v998, 0.0
          %v1053 = vmax.f32 %v1000, 0.0
          %v1054 = vmax.f32 %v1002, 0.0
          %v1055 = vmax.f32 %v1004, 0.0
          %v1056 = vmax.f32 %v1008, 0.0
          %v1057 = vmax.f32 %v1010, 0.0
          %v1058 = vmax.f32 %v1012, 0.0
          %v1059 = vmax.f32 %v1014, 0.0
          %v1060 = vmax.f32 %v1018, 0.0
          %v1061 = vmax.f32 %v1020, 0.0
          %v1062 = vmax.f32 %v1022, 0.0
          %v1063 = vmax.f32 %v1024, 0.0
          %v1064 = vmax.f32 %v1028, 0.0
          %v1065 = vmax.f32 %v1030, 0.0
          %v1066 = vmax.f32 %v1032, 0.0
          %v1067 = vmax.f32 %v1034, 0.0
        $region69: #{tpu_custom_call.1} parent=47 // loop_footer
          %s669 = sadd.s32 %s667, 1
        $region70: #{tpu_custom_call.1} parent=47 // loop_footer_branch
          %666 = sbr.rel target = $region66
        $region71: #{tpu_custom_call.1} parent=47 // loop_exit
          _
        %v1068 = vpack.c.bf16 %v674, %v672
        %v1069 = vpack.c.bf16 %v675, %v673
        %v1070 = vpack.c.bf16 %v678, %v676
        %v1071 = vpack.c.bf16 %v679, %v677
        %v1072 = vpack.c.bf16 %v682, %v680
        %v1073 = vpack.c.bf16 %v683, %v681
        %v1074 = vpack.c.bf16 %v686, %v684
        %v1075 = vpack.c.bf16 %v687, %v685
        %v1076 = vpack.c.bf16 %v690, %v688
        %v1077 = vpack.c.bf16 %v691, %v689
        %v1078 = vpack.c.bf16 %v694, %v692
        %v1079 = vpack.c.bf16 %v695, %v693
        %v1080 = vpack.c.bf16 %v698, %v696
        %v1081 = vpack.c.bf16 %v699, %v697
        %v1082 = vpack.c.bf16 %v702, %v700
        %v1083 = vpack.c.bf16 %v703, %v701
        %v1084 = vld [vmem:[#allocation10] sm:$0xf]
        %v1085 = vld [vmem:[#allocation10 + $0x4] sm:$0xf]
        %v1086 = vld [vmem:[#allocation10 + $0x8] sm:$0xf]
        %v1087 = vld [vmem:[#allocation10 + $0xc] sm:$0xf]
        %v1088 = vld [vmem:[#allocation10 + $0x10] sm:$0xf]
        %v1089 = vld [vmem:[#allocation10 + $0x14] sm:$0xf]
        %v1090 = vld [vmem:[#allocation10 + $0x18] sm:$0xf]
        %v1091 = vld [vmem:[#allocation10 + $0x1c] sm:$0xf]
        %v1092 = vld [vmem:[#allocation10 + $0x20] sm:$0xf]
        %v1093 = vld [vmem:[#allocation10 + $0x24] sm:$0xf]
        %v1094 = vld [vmem:[#allocation10 + $0x28] sm:$0xf]
        %v1095 = vld [vmem:[#allocation10 + $0x2c] sm:$0xf]
        %v1096 = vld [vmem:[#allocation10 + $0x30] sm:$0xf]
        %v1097 = vld [vmem:[#allocation10 + $0x34] sm:$0xf]
        %v1098 = vld [vmem:[#allocation10 + $0x38] sm:$0xf]
        %v1099 = vld [vmem:[#allocation10 + $0x3c] sm:$0xf]
        %v1100 = vld [vmem:[#allocation10 + $0x40] sm:$0xf]
        %v1101 = vld [vmem:[#allocation10 + $0x44] sm:$0xf]
        %v1102 = vld [vmem:[#allocation10 + $0x48] sm:$0xf]
        %v1103 = vld [vmem:[#allocation10 + $0x4c] sm:$0xf]
        %v1104 = vld [vmem:[#allocation10 + $0x50] sm:$0xf]
        %v1105 = vld [vmem:[#allocation10 + $0x54] sm:$0xf]
        %v1106 = vld [vmem:[#allocation10 + $0x58] sm:$0xf]
        %v1107 = vld [vmem:[#allocation10 + $0x5c] sm:$0xf]
        %v1108 = vld [vmem:[#allocation10 + $0x60] sm:$0xf]
        %v1109 = vld [vmem:[#allocation10 + $0x64] sm:$0xf]
        %v1110 = vld [vmem:[#allocation10 + $0x68] sm:$0xf]
        %v1111 = vld [vmem:[#allocation10 + $0x6c] sm:$0xf]
        %v1112 = vld [vmem:[#allocation10 + $0x70] sm:$0xf]
        %v1113 = vld [vmem:[#allocation10 + $0x74] sm:$0xf]
        %v1114 = vld [vmem:[#allocation10 + $0x78] sm:$0xf]
        %v1115 = vld [vmem:[#allocation10 + $0x7c] sm:$0xf]
        %v1117 = vlaneseq
        %v1118 = vshrl.u32 %v1117, 7
        %v1119 = vsub.s32 0, %v1118
        %v1120 = vrot.slane %v349, %v1119
        %v1154 = vunpack.c.l.b16 %v1084
        %v1155 = vunpack.c.l.b16 %v1085
        %v1156 = vunpack.c.l.b16 %v1086
        %v1157 = vunpack.c.l.b16 %v1087
        %v1158 = vunpack.c.l.b16 %v1088
        %v1159 = vunpack.c.l.b16 %v1089
        %v1160 = vunpack.c.l.b16 %v1090
        %v1161 = vunpack.c.l.b16 %v1091
        %v1162 = vunpack.c.l.b16 %v1092
        %v1163 = vunpack.c.l.b16 %v1093
        %v1164 = vunpack.c.l.b16 %v1094
        %v1165 = vunpack.c.l.b16 %v1095
        %v1166 = vunpack.c.l.b16 %v1096
        %v1167 = vunpack.c.l.b16 %v1097
        %v1168 = vunpack.c.l.b16 %v1098
        %v1169 = vunpack.c.l.b16 %v1099
        %v1170 = vunpack.c.l.b16 %v1100
        %v1171 = vunpack.c.l.b16 %v1101
        %v1172 = vunpack.c.l.b16 %v1102
        %v1173 = vunpack.c.l.b16 %v1103
        %v1174 = vunpack.c.l.b16 %v1104
        %v1175 = vunpack.c.l.b16 %v1105
        %v1176 = vunpack.c.l.b16 %v1106
        %v1177 = vunpack.c.l.b16 %v1107
        %v1178 = vunpack.c.l.b16 %v1108
        %v1179 = vunpack.c.l.b16 %v1109
        %v1180 = vunpack.c.l.b16 %v1110
        %v1181 = vunpack.c.l.b16 %v1111
        %v1182 = vunpack.c.l.b16 %v1112
        %v1183 = vunpack.c.l.b16 %v1113
        %v1184 = vunpack.c.l.b16 %v1114
        %v1185 = vunpack.c.l.b16 %v1115
        %v1186 = vpack.c.b16 %v1155, %v1154
        %v1187 = vpack.c.b16 %v1157, %v1156
        %v1188 = vpack.c.b16 %v1159, %v1158
        %v1189 = vpack.c.b16 %v1161, %v1160
        %v1190 = vpack.c.b16 %v1163, %v1162
        %v1191 = vpack.c.b16 %v1165, %v1164
        %v1192 = vpack.c.b16 %v1167, %v1166
        %v1193 = vpack.c.b16 %v1169, %v1168
        %v1194 = vpack.c.b16 %v1171, %v1170
        %v1195 = vpack.c.b16 %v1173, %v1172
        %v1196 = vpack.c.b16 %v1175, %v1174
        %v1197 = vpack.c.b16 %v1177, %v1176
        %v1198 = vpack.c.b16 %v1179, %v1178
        %v1199 = vpack.c.b16 %v1181, %v1180
        %v1200 = vpack.c.b16 %v1183, %v1182
        %v1201 = vpack.c.b16 %v1185, %v1184
        %1218 = vmatprep.subr.bf16.mxu0 0
        %1219 = vmatpush1.bf16.msra.mxu0 %v1186
        %1220 = vmatprep.subr.bf16.mxu0 0
        %1221 = vmatpush1.bf16.msra.mxu0 %v1187
        %1222 = vmatprep.subr.bf16.mxu0 0
        %1223 = vmatpush1.bf16.msra.mxu0 %v1188
        %1224 = vmatprep.subr.bf16.mxu0 0
        %1225 = vmatpush1.bf16.msra.mxu0 %v1189
        %1226 = vmatprep.subr.bf16.mxu0 0
        %1227 = vmatpush1.bf16.msra.mxu0 %v1190
        %1228 = vmatprep.subr.bf16.mxu0 0
        %1229 = vmatpush1.bf16.msra.mxu0 %v1191
        %1230 = vmatprep.subr.bf16.mxu0 0
        %1231 = vmatpush1.bf16.msra.mxu0 %v1192
        %1232 = vmatprep.subr.bf16.mxu0 0
        %1233 = vmatpush1.bf16.msra.mxu0 %v1193
        %1234 = vmatprep.subr.bf16.mxu0 0
        %1235 = vmatpush1.bf16.msra.mxu0 %v1194
        %1236 = vmatprep.subr.bf16.mxu0 0
        %1237 = vmatpush1.bf16.msra.mxu0 %v1195
        %1238 = vmatprep.subr.bf16.mxu0 0
        %1239 = vmatpush1.bf16.msra.mxu0 %v1196
        %1240 = vmatprep.subr.bf16.mxu0 0
        %1241 = vmatpush1.bf16.msra.mxu0 %v1197
        %1242 = vmatprep.subr.bf16.mxu0 0
        %1243 = vmatpush1.bf16.msra.mxu0 %v1198
        %1244 = vmatprep.subr.bf16.mxu0 0
        %1245 = vmatpush1.bf16.msra.mxu0 %v1199
        %1246 = vmatprep.subr.bf16.mxu0 0
        %1247 = vmatpush1.bf16.msra.mxu0 %v1200
        %1248 = vmatprep.subr.bf16.mxu0 0
        %1249 = vmatpush1.bf16.msra.mxu0 %v1201
        %1250 = vmatprep.mubr.bf16.mxu0 %v1069
        %1251 = vmatmul.mubr.bf16.gmra.mrb[0].mxu0 %v1068
        %v1252 = vpop.f32.mrb[0].mxu0
        %v1253 = vadd.f32 %v1120, %v1252
        %v1254 = vpop.f32.mrb[0].mxu0
        %v1255 = vpop.f32.mrb[0].mxu0
        %v1256 = vadd.f32 %v1120, %v1255
        %v1257 = vpop.f32.mrb[0].mxu0
        %1258 = vmatprep.mubr.bf16.mxu0 %v1071
        %1259 = vmatmul.mubr.bf16.gmra.mrb[0].mxu0 %v1070
        %v1260 = vpop.f32.mrb[0].mxu0
        %v1261 = vadd.f32 %v1120, %v1260
        %v1262 = vpop.f32.mrb[0].mxu0
        %v1263 = vpop.f32.mrb[0].mxu0
        %v1264 = vadd.f32 %v1120, %v1263
        %v1265 = vpop.f32.mrb[0].mxu0
        %1266 = vmatprep.mubr.bf16.mxu0 %v1073
        %1267 = vmatmul.mubr.bf16.gmra.mrb[0].mxu0 %v1072
        %v1268 = vpop.f32.mrb[0].mxu0
        %v1269 = vadd.f32 %v1120, %v1268
        %v1270 = vpop.f32.mrb[0].mxu0
        %v1271 = vpop.f32.mrb[0].mxu0
        %v1272 = vadd.f32 %v1120, %v1271
        %v1273 = vpop.f32.mrb[0].mxu0
        %1274 = vmatprep.mubr.bf16.mxu0 %v1075
        %1275 = vmatmul.mubr.bf16.gmra.mrb[0].mxu0 %v1074
        %v1276 = vpop.f32.mrb[0].mxu0
        %v1277 = vadd.f32 %v1120, %v1276
        %v1278 = vpop.f32.mrb[0].mxu0
        %v1279 = vpop.f32.mrb[0].mxu0
        %v1280 = vadd.f32 %v1120, %v1279
        %v1281 = vpop.f32.mrb[0].mxu0
        %1282 = vmatprep.mubr.bf16.mxu0 %v1077
        %1283 = vmatmul.mubr.bf16.gmra.mrb[0].mxu0 %v1076
        %v1284 = vpop.f32.mrb[0].mxu0
        %v1285 = vadd.f32 %v1120, %v1284
        %v1286 = vpop.f32.mrb[0].mxu0
        %v1287 = vpop.f32.mrb[0].mxu0
        %v1288 = vadd.f32 %v1120, %v1287
        %v1289 = vpop.f32.mrb[0].mxu0
        %1290 = vmatprep.mubr.bf16.mxu0 %v1079
        %1291 = vmatmul.mubr.bf16.gmra.mrb[0].mxu0 %v1078
        %v1292 = vpop.f32.mrb[0].mxu0
        %v1293 = vadd.f32 %v1120, %v1292
        %v1294 = vpop.f32.mrb[0].mxu0
        %v1295 = vpop.f32.mrb[0].mxu0
        %v1296 = vadd.f32 %v1120, %v1295
        %v1297 = vpop.f32.mrb[0].mxu0
        %1298 = vmatprep.mubr.bf16.mxu0 %v1081
        %1299 = vmatmul.mubr.bf16.gmra.mrb[0].mxu0 %v1080
        %v1300 = vpop.f32.mrb[0].mxu0
        %v1301 = vadd.f32 %v1120, %v1300
        %v1302 = vpop.f32.mrb[0].mxu0
        %v1303 = vpop.f32.mrb[0].mxu0
        %v1304 = vadd.f32 %v1120, %v1303
        %v1305 = vpop.f32.mrb[0].mxu0
        %1306 = vmatprep.mubr.bf16.mxu0 %v1083
        %1307 = vmatmul.mubr.bf16.gmra.mrb[0].mxu0 %v1082
        %v1308 = vpop.f32.mrb[0].mxu0
        %v1309 = vadd.f32 %v1120, %v1308
        %v1310 = vpop.f32.mrb[0].mxu0
        %v1311 = vpop.f32.mrb[0].mxu0
        %v1312 = vadd.f32 %v1120, %v1311
        %v1313 = vpop.f32.mrb[0].mxu0
        %1314 = vdwg.mxu0
        %1315 = vst [vmem:[%s342] sm:$0xff] %v1253
        %1316 = vst [vmem:[%s342 + $0x8] sm:$0xff] %v1256
        %1317 = vst [vmem:[%s342 + $0x10] sm:$0xff] %v1261
        %1318 = vst [vmem:[%s342 + $0x18] sm:$0xff] %v1264
        %1319 = vst [vmem:[%s342 + $0x20] sm:$0xff] %v1269
        %1320 = vst [vmem:[%s342 + $0x28] sm:$0xff] %v1272
        %1321 = vst [vmem:[%s342 + $0x30] sm:$0xff] %v1277
        %1322 = vst [vmem:[%s342 + $0x38] sm:$0xff] %v1280
        %1323 = vst [vmem:[%s342 + $0x40] sm:$0xff] %v1285
        %1324 = vst [vmem:[%s342 + $0x48] sm:$0xff] %v1288
        %1325 = vst [vmem:[%s342 + $0x50] sm:$0xff] %v1293
        %1326 = vst [vmem:[%s342 + $0x58] sm:$0xff] %v1296
        %1327 = vst [vmem:[%s342 + $0x60] sm:$0xff] %v1301
        %1328 = vst [vmem:[%s342 + $0x68] sm:$0xff] %v1304
        %1329 = vst [vmem:[%s342 + $0x70] sm:$0xff] %v1309
        %1330 = vst [vmem:[%s342 + $0x78] sm:$0xff] %v1312
        %s1331 = sand.u32 %s188, 1
        %s1332 = scalar_lea.sflag [#allocation6], %s1331
        %s1333 = sand.u32 %s188, 1
        %s1334 = smul.addr %s1333, 128
        %s1335 = scalar_lea.vmem [#allocation12], %s1334
        // Predicated region
        $region72: #{tpu_custom_call.1} parent=47 // pred_check
          %p1336 = pneg %p198
        $region73: #{tpu_custom_call.1} parent=47 // pred_check_branch
          %1338 = sbr.rel (%p1336) target = $region75
        $region74: #{tpu_custom_call.1} parent=47 // pred_region
          %s1339 = smul.u32 16, %s28
          %s1341 = ssub.s32 2048, 2048
          %1342 = vsyncadd %s1332, %s1341
          %s1343 = smul.addr %s1339, 128
          %s1344 = scalar_lea.hbm %s8, %s1343
          %s1345 = sshll.u32 %s1335, 4
          %s1346 = int_to_ptr.vmem [resolvable:$true] %s1345
          %1351 = dma.vmem_to_hbm [thread:$0]  %s1346, 2048, %s1344, %s1332, 128, 128, 8
        $region75: #{tpu_custom_call.1} parent=47 // pred_fallthru
          _
      $region48: #{tpu_custom_call.1} parent=5 // pred_fallthru
        _
      %p1352 = scmp.le.s32.totalorder 2, %s23
      // Predicated region
      $region76: #{tpu_custom_call.1} parent=5 // pred_check
        %p1353 = pneg %p1352
      $region77: #{tpu_custom_call.1} parent=5 // pred_check_branch
        %1355 = sbr.rel (%p1353) target = $region79
      $region78: #{tpu_custom_call.1} parent=5 // pred_region
        %s1356 = ssub.s32 %s23, 2
        // Predicated region
        $region80: #{tpu_custom_call.1} parent=78 // pred_check
          %p1357 = pneg %p204
        $region81: #{tpu_custom_call.1} parent=78 // pred_check_branch
          %1359 = sbr.rel (%p1357) target = $region83
        $region82: #{tpu_custom_call.1} parent=78 // pred_region
          %s1360 = sand.u32 %s189, 1
          %s1361 = scalar_lea.sflag [#allocation6], %s1360
          %s1362 = sand.u32 %s189, 1
          %s1363 = smul.addr %s1362, 128
          %s1364 = scalar_lea.vmem [#allocation12], %s1363
          %1365 = dma.done %s1361, 2048
        $region83: #{tpu_custom_call.1} parent=78 // pred_fallthru
          _
      $region79: #{tpu_custom_call.1} parent=5 // pred_fallthru
        _
    $region6: #{tpu_custom_call.1} parent=1 // loop_footer
      %s27 = sadd.s32 1, %s23
    $region7: #{tpu_custom_call.1} parent=1 // loop_footer_branch
      %22 = sbr.rel target = $region3
    $region8: #{tpu_custom_call.1} parent=1 // loop_exit
      _
    %1366 = vsyncpa [#allocation5], 1
    %s1367 = scalar_lea.sflag [#allocation5], 1
    %1368 = vsyncpa %s1367, 1
    %1369 = vsyncpa [#allocation8], 1
    %1370 = vsyncpa [#allocation11], 1
    %1371 = vsyncpa [#allocation6], 1
    %s1372 = scalar_lea.sflag [#allocation6], 1
    %1373 = vsyncpa %s1372, 1

</llo_original>
